<compile_context>
chip_gen: v6e
topology: v6e:2x2x1
jax: 0.10.0
libtpu: 0.0.40
codegen_flags: <defaults>
</compile_context>

<pallas_src>
import jax
import jax.numpy as jnp
from jax.experimental import pallas as pl
from jax.experimental.pallas import tpu as pltpu


def _round_up(x: int, m: int) -> int:
    return ((x + m - 1) // m) * m


def _round_down(x: int, m: int) -> int:
    return (x // m) * m


# ---------------------------------------------------------------------------
# Kernel: one batch tile through the whole MLP, batch on the lane axis.
# ---------------------------------------------------------------------------
def value_mlp_kernel(x_ref, w1t_ref, b1_ref, w2t_ref, b2_ref, w3_ref, b3_ref, o_ref):
    # Layer 1: (Hp, S) @ (S, tb) -> (Hp, tb); MXU with f32 accumulation.
    h = jnp.dot(w1t_ref[...], x_ref[...], preferred_element_type=jnp.float32)
    h = jnp.maximum(h + b1_ref[...], 0.0)                       # bias + ReLU in f32 (VPU)

    # Layer 2: (Hp, Hp) @ (Hp, tb) -> (Hp, tb); cast activations to the weight
    # dtype (bf16 MXU path when enabled; no-op in f32 mode), accumulate in f32.
    h = jnp.dot(w2t_ref[...], h.astype(w2t_ref.dtype), preferred_element_type=jnp.float32)
    h = jnp.maximum(h + b2_ref[...], 0.0)

    # Output head: (8, Hp) @ (Hp, tb) -> (8, tb) on the MXU; only row 0 holds the
    # real head weights (rows 1..7 are zero padding to a native sublane tile).
    # Row 0 is already lane-dense, so no relayout is needed for the (1, tb) store.
    head = jnp.dot(w3_ref[...], h.astype(w3_ref.dtype), preferred_element_type=jnp.float32)
    o_ref[...] = (head[0:1, :] + b3_ref[...]).astype(o_ref.dtype)


# ---------------------------------------------------------------------------
# One-time parameter preparation (hoisted out of the per-call path).
# ---------------------------------------------------------------------------
def prepare_params(params, compute_dtype=jnp.float32):
    """Pad the hidden dim to a multiple of 128, transpose for batch-on-lanes,
    and cast the matmul weights to `compute_dtype`.

    compute_dtype=jnp.bfloat16 is recommended on ALL TPU generations (v5e/v6e/v7x
    MXUs are bf16-native); accumulation, biases and ReLU stay in float32.
    Keep the default float32 if callers need f32-exact values.
    """
    w1, b1, w2, b2, w3, b3 = params
    S, H = w1.shape
    Hp = _round_up(H, 128)
    pad = Hp - H
    if pad:
        # Zero padding is exact through the ReLU chain (padded lanes stay 0).
        w1 = jnp.pad(w1, ((0, 0), (0, pad)))
        b1 = jnp.pad(b1, ((0, pad),))
        w2 = jnp.pad(w2, ((0, pad), (0, pad)))
        b2 = jnp.pad(b2, ((0, pad),))
        w3 = jnp.pad(w3, ((0, pad), (0, 0)))

    w1t = jnp.asarray(w1.T, dtype=compute_dtype)                 # (Hp, S)
    w2t = jnp.asarray(w2.T, dtype=compute_dtype)                 # (Hp, Hp)
    # Head weight as an 8-row block (row 0 real, rows 1..7 zero) -> native-tile M
    # dim for the head matmul.
    w3r = jnp.zeros((8, Hp), compute_dtype).at[0].set(w3[:, 0].astype(compute_dtype))
    b1c = b1.reshape(Hp, 1).astype(jnp.float32)
    b2c = b2.reshape(Hp, 1).astype(jnp.float32)
    b3c = b3.reshape(1, 1).astype(jnp.float32)
    return (w1t, b1c, w2t, b2c, w3r, b3c)


# ---------------------------------------------------------------------------
# Tile selection / VMEM budgeting.
# ---------------------------------------------------------------------------
_VMEM_TILE_BUDGET = 40 * 1024 * 1024   # conservative cap for the tile-size search


def _vmem_estimate(tile_b, S, Hp, x_item, w_item):
    x_buf = 2 * S * tile_b * x_item                      # double-buffered streamed state
    o_buf = 2 * tile_b * 4                               # double-buffered output row
    wts = 2 * ((Hp * S + Hp * Hp + 8 * Hp) * w_item + (2 * Hp + 1) * 4)   # resident weights/biases
    act = 3 * Hp * tile_b * 4                            # f32 activation temporaries
    return x_buf + o_buf + wts + act


def _select_tile_b(B, requested, S, Hp, x_item, w_item):
    if requested is not None:
        tile = max(128, _round_up(requested, 128))
    else:
        # Per-step compute/DMA is far below the ~0.35us grid-step overhead at these
        # shapes -> use large tiles by default.
        tile = 2048
        if B >= 256:
            # Keep >= 2 grid steps so ("parallel",) can split the batch across
            # v7x's two TensorCores (near-zero cost on single-TC v5e/v6e).
            tile = min(tile, max(128, _round_down(B // 2, 128)))
    tile = min(tile, _round_up(B, 128))
    while tile > 128 and _vmem_estimate(tile, S, Hp, x_item, w_item) > _VMEM_TILE_BUDGET:
        tile = max(128, _round_down(tile // 2, 128))
    return tile


# ---------------------------------------------------------------------------
# Forward wrapper.
# ---------------------------------------------------------------------------
def value_function_forward(state, prepared_params, *, tile_b=None):
    """state: (B, state_dim) float32 -> (B,) float32.

    `prepared_params` comes from prepare_params() (padding/casts done once).
    """
    w1t, b1c, w2t, b2c, w3r, b3c = prepared_params
    B, S = state.shape
    Hp = w1t.shape[0]
    cdt = w1t.dtype
    x_item = jnp.dtype(cdt).itemsize
    w_item = jnp.dtype(cdt).itemsize

    # Single fused transpose(+cast) pass over the state: batch lands on the lane
    # axis, the optional bf16 cast halves the bytes the kernel streams from HBM.
    x_t = state.T.astype(cdt)                            # (S, B)

    tile_b = _select_tile_b(B, tile_b, S, Hp, x_item, w_item)
    num_tiles = pl.cdiv(B, tile_b)

    est = _vmem_estimate(tile_b, S, Hp, x_item, w_item)
    vmem_limit = None
    if est > 12 * 1024 * 1024:
        vmem_limit = int(min(48 * 1024 * 1024, est + est // 4))
    # TODO(synk): for very large hidden dims, also set pipeline_mode=pl.Buffered(1)
    # on the resident-weight BlockSpecs to drop their second VMEM buffer (v7x: 64MiB).

    flops = 2 * B * (S * Hp + Hp * Hp + Hp)
    bytes_accessed = (B * S * x_item + B * 4
                      + (Hp * S + Hp * Hp + 8 * Hp) * w_item + (2 * Hp + 1) * 4)

    out = pl.pallas_call(
        value_mlp_kernel,
        out_shape=jax.ShapeDtypeStruct((1, B), jnp.float32),
        grid_spec=pl.GridSpec(
            grid=(num_tiles,),
            in_specs=[
                pl.BlockSpec((S, tile_b), lambda i: (0, i)),    # state tile (streamed)
                pl.BlockSpec((Hp, S), lambda i: (0, 0)),        # W1^T (resident)
                pl.BlockSpec((Hp, 1), lambda i: (0, 0)),        # b1
                pl.BlockSpec((Hp, Hp), lambda i: (0, 0)),       # W2^T (resident)
                pl.BlockSpec((Hp, 1), lambda i: (0, 0)),        # b2
                pl.BlockSpec((8, Hp), lambda i: (0, 0)),        # w3 (row 0 real)
                pl.BlockSpec((1, 1), lambda i: (0, 0)),         # b3
            ],
            out_specs=pl.BlockSpec((1, tile_b), lambda i: (0, i)),  # lane-dense output row
        ),
        compiler_params=pltpu.CompilerParams(
            dimension_semantics=("parallel",),
            vmem_limit_bytes=vmem_limit,
        ),
        cost_estimate=pl.CostEstimate(flops=flops, transcendentals=0,
                                      bytes_accessed=bytes_accessed),
    )(x_t, w1t, b1c, w2t, b2c, w3r, b3c)

    # Squeeze(-1) of the PyTorch module; partial final tiles already dropped by Pallas.
    return out[0]


# ---------------------------------------------------------------------------
# Reference / init helpers.
# ---------------------------------------------------------------------------
def init_params(key, state_dim, hidden_dim):
    """Deterministic init mimicking nn.Linear default (uniform +/- 1/sqrt(fan_in))."""
    def linear(k, fan_in, fan_out):
        k_w, k_b = jax.random.split(k)
        bound = 1.0 / jnp.sqrt(fan_in)
        w = jax.random.uniform(k_w, (fan_in, fan_out), jnp.float32, -bound, bound)
        b = jax.random.uniform(k_b, (fan_out,), jnp.float32, -bound, bound)
        return w, b

    k1, k2, k3 = jax.random.split(key, 3)
    w1, b1 = linear(k1, state_dim, hidden_dim)
    w2, b2 = linear(k2, hidden_dim, hidden_dim)
    w3, b3 = linear(k3, hidden_dim, 1)
    return (w1, b1, w2, b2, w3, b3)


def reference_forward(state, params):
    w1, b1, w2, b2, w3, b3 = params
    h1 = jnp.maximum(state @ w1 + b1, 0.0)
    h2 = jnp.maximum(h1 @ w2 + b2, 0.0)
    return (h2 @ w3 + b3)[:, 0]


if __name__ == "__main__":
    key = jax.random.PRNGKey(0)
    STATE_DIM, HIDDEN = 16, 32   # small shapes; n_hidden=2 as in the module default

    k_params, k_state1, k_state2 = jax.random.split(key, 3)
    params = init_params(k_params, STATE_DIM, HIDDEN)
    prep_f32 = prepare_params(params, compute_dtype=jnp.float32)

    ok = True

    # Test 1: tiny batch (single partial tile), f32 compute.
    B1 = 16
    state1 = jax.random.normal(k_state1, (B1, STATE_DIM), jnp.float32)
    out1 = jax.block_until_ready(value_function_forward(state1, prep_f32))
    ref1 = reference_forward(state1, params)
    ok &= out1.shape == (B1,)
    ok &= bool(jnp.allclose(out1, ref1, atol=1e-4, rtol=1e-4))

    # Test 2: non-divisible batch, multi-step grid (partial input + output blocks).
    B2 = 200
    state2 = jax.random.normal(k_state2, (B2, STATE_DIM), jnp.float32)
    out2 = jax.block_until_ready(value_function_forward(state2, prep_f32, tile_b=128))
    ref2 = reference_forward(state2, params)
    ok &= out2.shape == (B2,)
    ok &= bool(jnp.allclose(out2, ref2, atol=1e-4, rtol=1e-4))

    # Test 3: bf16 MXU path (all TPU generations); looser tolerance vs f32 reference.
    prep_bf16 = prepare_params(params, compute_dtype=jnp.bfloat16)
    out3 = jax.block_until_ready(value_function_forward(state1, prep_bf16))
    ok &= out3.shape == (B1,)
    ok &= bool(jnp.allclose(out3, ref1, atol=5e-2, rtol=5e-2))

    assert ok, "mismatch vs reference"
    print("KERNEL_OK")
</pallas_src>

<mosaic_0001>
module attributes {stable_mosaic.version = 11 : i64} {
  func.func @value_mlp_kernel(%arg0: i32, %arg1: memref<16x128xf32, #tpu.memory_space<vmem>>, %arg2: memref<128x16xf32, #tpu.memory_space<vmem>>, %arg3: memref<128x1xf32, #tpu.memory_space<vmem>>, %arg4: memref<128x128xf32, #tpu.memory_space<vmem>>, %arg5: memref<128x1xf32, #tpu.memory_space<vmem>>, %arg6: memref<8x128xf32, #tpu.memory_space<vmem>>, %arg7: memref<1x1xf32, #tpu.memory_space<vmem>>, %arg8: memref<1x128xf32, #tpu.memory_space<vmem>>) attributes {dimension_semantics = [#tpu.dimension_semantics<parallel>], iteration_bounds = array<i64: 1>, scalar_prefetch = 0 : i64, scratch_operands = 0 : i64, tpu.core_type = #tpu.core_type<tc>, window_params = [{transform_indices = @transform_0, window_bounds = array<i64: 16, 128>}, {pipeline_mode = #tpu.pipeline_mode<synchronous>, transform_indices = @transform_1, window_bounds = array<i64: 128, 16>}, {pipeline_mode = #tpu.pipeline_mode<synchronous>, transform_indices = @transform_2, window_bounds = array<i64: 128, 1>}, {pipeline_mode = #tpu.pipeline_mode<synchronous>, transform_indices = @transform_3, window_bounds = array<i64: 128, 128>}, {pipeline_mode = #tpu.pipeline_mode<synchronous>, transform_indices = @transform_4, window_bounds = array<i64: 128, 1>}, {pipeline_mode = #tpu.pipeline_mode<synchronous>, transform_indices = @transform_5, window_bounds = array<i64: 8, 128>}, {pipeline_mode = #tpu.pipeline_mode<synchronous>, transform_indices = @transform_6, window_bounds = array<i64: 1, 1>}, {transform_indices = @transform_7, window_bounds = array<i64: 1, 128>}]} {
    %c0 = arith.constant 0 : index
    %c0_0 = arith.constant 0 : index
    %0 = vector.load %arg2[%c0, %c0_0] : memref<128x16xf32, #tpu.memory_space<vmem>>, vector<128x16xf32>
    %c0_1 = arith.constant 0 : index
    %c0_2 = arith.constant 0 : index
    %1 = vector.load %arg1[%c0_1, %c0_2] : memref<16x128xf32, #tpu.memory_space<vmem>>, vector<16x128xf32>
    %cst = arith.constant dense<0.000000e+00> : vector<128x128xf32>
    %2 = tpu.matmul %0, %1, %cst {dimension_numbers = #tpu.dot_dimension_numbers<[1], [0], [0], [1], [0, 0, 1, 1], [], []>} : vector<128x16xf32>, vector<16x128xf32>, vector<128x128xf32> -> vector<128x128xf32>
    %c0_3 = arith.constant 0 : index
    %c0_4 = arith.constant 0 : index
    %3 = vector.load %arg3[%c0_3, %c0_4] : memref<128x1xf32, #tpu.memory_space<vmem>>, vector<128x1xf32>
    %4 = vector.broadcast %3 : vector<128x1xf32> to vector<128x128xf32>
    %5 = arith.addf %2, %4 : vector<128x128xf32>
    %cst_5 = arith.constant 0.000000e+00 : f32
    %6 = vector.broadcast %cst_5 : f32 to vector<128x128xf32>
    %7 = arith.maximumf %5, %6 : vector<128x128xf32>
    %c0_6 = arith.constant 0 : index
    %c0_7 = arith.constant 0 : index
    %8 = vector.load %arg4[%c0_6, %c0_7] : memref<128x128xf32, #tpu.memory_space<vmem>>, vector<128x128xf32>
    %cst_8 = arith.constant dense<0.000000e+00> : vector<128x128xf32>
    %9 = tpu.matmul %8, %7, %cst_8 {dimension_numbers = #tpu.dot_dimension_numbers<[1], [0], [0], [1], [0, 0, 1, 1], [], []>} : vector<128x128xf32>, vector<128x128xf32>, vector<128x128xf32> -> vector<128x128xf32>
    %c0_9 = arith.constant 0 : index
    %c0_10 = arith.constant 0 : index
    %10 = vector.load %arg5[%c0_9, %c0_10] : memref<128x1xf32, #tpu.memory_space<vmem>>, vector<128x1xf32>
    %11 = vector.broadcast %10 : vector<128x1xf32> to vector<128x128xf32>
    %12 = arith.addf %9, %11 : vector<128x128xf32>
    %cst_11 = arith.constant 0.000000e+00 : f32
    %13 = vector.broadcast %cst_11 : f32 to vector<128x128xf32>
    %14 = arith.maximumf %12, %13 : vector<128x128xf32>
    %c0_12 = arith.constant 0 : index
    %c0_13 = arith.constant 0 : index
    %15 = vector.load %arg6[%c0_12, %c0_13] : memref<8x128xf32, #tpu.memory_space<vmem>>, vector<8x128xf32>
    %cst_14 = arith.constant dense<0.000000e+00> : vector<8x128xf32>
    %16 = tpu.matmul %15, %14, %cst_14 {dimension_numbers = #tpu.dot_dimension_numbers<[1], [0], [0], [1], [0, 0, 1, 1], [], []>} : vector<8x128xf32>, vector<128x128xf32>, vector<8x128xf32> -> vector<8x128xf32>
    %17 = vector.extract_strided_slice %16 {offsets = [0, 0], sizes = [1, 128], strides = [1, 1]} : vector<8x128xf32> to vector<1x128xf32>
    %c0_15 = arith.constant 0 : index
    %c0_16 = arith.constant 0 : index
    %18 = vector.load %arg7[%c0_15, %c0_16] : memref<1x1xf32, #tpu.memory_space<vmem>>, vector<1x1xf32>
    %19 = vector.broadcast %18 : vector<1x1xf32> to vector<1x128xf32>
    %20 = arith.addf %17, %19 : vector<1x128xf32>
    %c0_17 = arith.constant 0 : index
    %c0_18 = arith.constant 0 : index
    %21 = vector.load %arg8[%c0_17, %c0_18] : memref<1x128xf32, #tpu.memory_space<vmem>>, vector<1x128xf32>
    tpu.vector_store %arg8[%c0_17, %c0_18], %20 {strides = array<i32>} : memref<1x128xf32, #tpu.memory_space<vmem>>, vector<1x128xf32>,
    return
  }
  func.func @transform_0(%arg0: i32) -> (i32, i32) {
    %c0_i32 = arith.constant 0 : i32
    %c0_i32_0 = arith.constant 0 : i32
    return %c0_i32, %arg0 : i32, i32
  }
  func.func @transform_1(%arg0: i32) -> (i32, i32) {
    %c0_i32 = arith.constant 0 : i32
    %c0_i32_0 = arith.constant 0 : i32
    %c0_i32_1 = arith.constant 0 : i32
    return %c0_i32, %c0_i32_0 : i32, i32
  }
  func.func @transform_2(%arg0: i32) -> (i32, i32) {
    %c0_i32 = arith.constant 0 : i32
    %c0_i32_0 = arith.constant 0 : i32
    %c0_i32_1 = arith.constant 0 : i32
    return %c0_i32, %c0_i32_0 : i32, i32
  }
  func.func @transform_3(%arg0: i32) -> (i32, i32) {
    %c0_i32 = arith.constant 0 : i32
    %c0_i32_0 = arith.constant 0 : i32
    %c0_i32_1 = arith.constant 0 : i32
    return %c0_i32, %c0_i32_0 : i32, i32
  }
  func.func @transform_4(%arg0: i32) -> (i32, i32) {
    %c0_i32 = arith.constant 0 : i32
    %c0_i32_0 = arith.constant 0 : i32
    %c0_i32_1 = arith.constant 0 : i32
    return %c0_i32, %c0_i32_0 : i32, i32
  }
  func.func @transform_5(%arg0: i32) -> (i32, i32) {
    %c0_i32 = arith.constant 0 : i32
    %c0_i32_0 = arith.constant 0 : i32
    %c0_i32_1 = arith.constant 0 : i32
    return %c0_i32, %c0_i32_0 : i32, i32
  }
  func.func @transform_6(%arg0: i32) -> (i32, i32) {
    %c0_i32 = arith.constant 0 : i32
    %c0_i32_0 = arith.constant 0 : i32
    %c0_i32_1 = arith.constant 0 : i32
    return %c0_i32, %c0_i32_0 : i32, i32
  }
  func.func @transform_7(%arg0: i32) -> (i32, i32) {
    %c0_i32 = arith.constant 0 : i32
    %c0_i32_0 = arith.constant 0 : i32
    return %c0_i32, %arg0 : i32, i32
  }
}

</mosaic_0001>

<llo_original>
// kernel: tpu_custom_call.1
$region0: #{tpu_custom_call.1}
  #allocation0 [shape = 'u32[]', space=smem, size = 0x4, offset = 0x4, fixed_abs, tag = 'smem constant byte address 0x4 - core index']
  #allocation1 [shape = 'u32[144,128]{1,0:T(1,128)}', space=vmem, size = 0x12000, scoped, tag = 'internal scratch']
  #allocation2 [shape = 'f32[1,1]{1,0:T(1,128)S(1)}', space=vmem, size = 0x200, scoped, tag = 'scoped memory for tpu_custom_call.1']
  %s0 = inlined_call_operand.vmem [shape: f32[16,16], index: 0, kind: input, shape index: {}]
  %s1 = inlined_call_operand.vmem [shape: f32[128,16], index: 1, kind: input, shape index: {}]
  %s2 = inlined_call_operand.vmem [shape: f32[128,1], index: 2, kind: input, shape index: {}]
  %s3 = inlined_call_operand.vmem [shape: f32[128,128], index: 3, kind: input, shape index: {}]
  %s4 = inlined_call_operand.vmem [shape: f32[128,1], index: 4, kind: input, shape index: {}]
  %s5 = inlined_call_operand.vmem [shape: f32[8,128], index: 5, kind: input, shape index: {}]
  %s6 = inlined_call_operand.<no memory space> [shape: f32[1,1], index: 6, kind: input, shape index: {}]
  %s7 = inlined_call_operand.hbm [shape: f32[1,16], index: 7, kind: output, shape index: {}]
  %s8 = sld [smem:[#allocation0]]
  $region38: #{tpu_custom_call.1} parent=0
    _
  %s10 = ssub.s32 1, %s8
  %s11 = scalar_select 0, %s10, %s8
  %v12 = vstv %s6
  %13 = vst [vmem:[#allocation2] sm:$0x1] %v12
  $region1: #{tpu_custom_call.1} parent=0
    #allocation3 [shape = 'u8[512]{0}', space=vmem, size = 0x400, scoped, tag = 'output window, operand 0, single buffered']
    #allocation4 [shape = 's32[1]{0}', space=sflag, size = 0x4, scoped, tag = 'scoped memory for tpu_custom_call.1']
    %14 = vsyncpa [#allocation4], 0
    // Predicated region
    $region2: #{tpu_custom_call.1} parent=1 // pred_check
      _
    $region3: #{tpu_custom_call.1} parent=1 // pred_check_branch
      %16 = sbr.rel (0) target = $region5
    $region4: #{tpu_custom_call.1} parent=1 // pred_region
      _
    $region5: #{tpu_custom_call.1} parent=1 // pred_fallthru
      _
    // Predicated region
    $region6: #{tpu_custom_call.1} parent=1 // pred_check
      _
    $region7: #{tpu_custom_call.1} parent=1 // pred_check_branch
      %18 = sbr.rel (0) target = $region9
    $region8: #{tpu_custom_call.1} parent=1 // pred_region
      _
    $region9: #{tpu_custom_call.1} parent=1 // pred_fallthru
      _
    // Predicated region
    $region10: #{tpu_custom_call.1} parent=1 // pred_check
      _
    $region11: #{tpu_custom_call.1} parent=1 // pred_check_branch
      %20 = sbr.rel (0) target = $region13
    $region12: #{tpu_custom_call.1} parent=1 // pred_region
      _
    $region13: #{tpu_custom_call.1} parent=1 // pred_fallthru
      _
    // Predicated region
    $region14: #{tpu_custom_call.1} parent=1 // pred_check
      _
    $region15: #{tpu_custom_call.1} parent=1 // pred_check_branch
      %22 = sbr.rel (0) target = $region17
    $region16: #{tpu_custom_call.1} parent=1 // pred_region
      _
    $region17: #{tpu_custom_call.1} parent=1 // pred_fallthru
      _
    // Predicated region
    $region18: #{tpu_custom_call.1} parent=1 // pred_check
      _
    $region19: #{tpu_custom_call.1} parent=1 // pred_check_branch
      %24 = sbr.rel (0) target = $region21
    $region20: #{tpu_custom_call.1} parent=1 // pred_region
      _
    $region21: #{tpu_custom_call.1} parent=1 // pred_fallthru
      _
    // Predicated region
    $region22: #{tpu_custom_call.1} parent=1 // pred_check
      _
    $region23: #{tpu_custom_call.1} parent=1 // pred_check_branch
      %26 = sbr.rel (0) target = $region25
    $region24: #{tpu_custom_call.1} parent=1 // pred_region
      _
    $region25: #{tpu_custom_call.1} parent=1 // pred_fallthru
      _
    // Predicated region
    $region26: #{tpu_custom_call.1} parent=1 // pred_check
      _
    $region27: #{tpu_custom_call.1} parent=1 // pred_check_branch
      %28 = sbr.rel (0) target = $region29
    $region28: #{tpu_custom_call.1} parent=1 // pred_region
      _
    $region29: #{tpu_custom_call.1} parent=1 // pred_fallthru
      _
    %v29 = vld [vmem:[%s1] sm:$0xff]
    %v30 = vld [vmem:[%s1 + $0x8] sm:$0xff]
    %v31 = vld [vmem:[%s1 + $0x10] sm:$0xff]
    %v32 = vld [vmem:[%s1 + $0x18] sm:$0xff]
    %v33 = vld [vmem:[%s1 + $0x20] sm:$0xff]
    %v34 = vld [vmem:[%s1 + $0x28] sm:$0xff]
    %v35 = vld [vmem:[%s1 + $0x30] sm:$0xff]
    %v36 = vld [vmem:[%s1 + $0x38] sm:$0xff]
    %v37 = vld [vmem:[%s1 + $0x40] sm:$0xff]
    %v38 = vld [vmem:[%s1 + $0x48] sm:$0xff]
    %v39 = vld [vmem:[%s1 + $0x50] sm:$0xff]
    %v40 = vld [vmem:[%s1 + $0x58] sm:$0xff]
    %v41 = vld [vmem:[%s1 + $0x60] sm:$0xff]
    %v42 = vld [vmem:[%s1 + $0x68] sm:$0xff]
    %v43 = vld [vmem:[%s1 + $0x70] sm:$0xff]
    %v44 = vld [vmem:[%s1 + $0x78] sm:$0xff]
    %v45 = vld [vmem:[%s0] sm:$0xff]
    %v46 = vld [vmem:[%s0 + $0x8] sm:$0xff]
    %v47 = vld [vmem:[%s2] sm:$0xff]
    %v48 = vld [vmem:[%s2 + $0x8] sm:$0xff]
    %v49 = vld [vmem:[%s2 + $0x10] sm:$0xff]
    %v50 = vld [vmem:[%s2 + $0x18] sm:$0xff]
    %v51 = vld [vmem:[%s2 + $0x20] sm:$0xff]
    %v52 = vld [vmem:[%s2 + $0x28] sm:$0xff]
    %v53 = vld [vmem:[%s2 + $0x30] sm:$0xff]
    %v54 = vld [vmem:[%s2 + $0x38] sm:$0xff]
    %v55 = vld [vmem:[%s2 + $0x40] sm:$0xff]
    %v56 = vld [vmem:[%s2 + $0x48] sm:$0xff]
    %v57 = vld [vmem:[%s2 + $0x50] sm:$0xff]
    %v58 = vld [vmem:[%s2 + $0x58] sm:$0xff]
    %v59 = vld [vmem:[%s2 + $0x60] sm:$0xff]
    %v60 = vld [vmem:[%s2 + $0x68] sm:$0xff]
    %v61 = vld [vmem:[%s2 + $0x70] sm:$0xff]
    %v62 = vld [vmem:[%s2 + $0x78] sm:$0xff]
    %64 = vset.pattern.permute.xlu0 0
    %65 = vperm.xlu0 %64, %v47
    %v66 = vpop.permute.xlu0 %65
    %69 = vset.pattern.permute.xlu0 0
    %70 = vperm.xlu0 %69, %v48
    %v71 = vpop.permute.xlu0 %70
    %74 = vset.pattern.permute.xlu0 0
    %75 = vperm.xlu0 %74, %v49
    %v76 = vpop.permute.xlu0 %75
    %79 = vset.pattern.permute.xlu0 0
    %80 = vperm.xlu0 %79, %v50
    %v81 = vpop.permute.xlu0 %80
    %84 = vset.pattern.permute.xlu0 0
    %85 = vperm.xlu0 %84, %v51
    %v86 = vpop.permute.xlu0 %85
    %89 = vset.pattern.permute.xlu0 0
    %90 = vperm.xlu0 %89, %v52
    %v91 = vpop.permute.xlu0 %90
    %94 = vset.pattern.permute.xlu0 0
    %95 = vperm.xlu0 %94, %v53
    %v96 = vpop.permute.xlu0 %95
    %99 = vset.pattern.permute.xlu0 0
    %100 = vperm.xlu0 %99, %v54
    %v101 = vpop.permute.xlu0 %100
    %104 = vset.pattern.permute.xlu0 0
    %105 = vperm.xlu0 %104, %v55
    %v106 = vpop.permute.xlu0 %105
    %109 = vset.pattern.permute.xlu0 0
    %110 = vperm.xlu0 %109, %v56
    %v111 = vpop.permute.xlu0 %110
    %114 = vset.pattern.permute.xlu0 0
    %115 = vperm.xlu0 %114, %v57
    %v116 = vpop.permute.xlu0 %115
    %119 = vset.pattern.permute.xlu0 0
    %120 = vperm.xlu0 %119, %v58
    %v121 = vpop.permute.xlu0 %120
    %124 = vset.pattern.permute.xlu0 0
    %125 = vperm.xlu0 %124, %v59
    %v126 = vpop.permute.xlu0 %125
    %129 = vset.pattern.permute.xlu0 0
    %130 = vperm.xlu0 %129, %v60
    %v131 = vpop.permute.xlu0 %130
    %134 = vset.pattern.permute.xlu0 0
    %135 = vperm.xlu0 %134, %v61
    %v136 = vpop.permute.xlu0 %135
    %139 = vset.pattern.permute.xlu0 0
    %140 = vperm.xlu0 %139, %v62
    %v141 = vpop.permute.xlu0 %140
    %vm143 = vcmask 130048
    %v145 = vsel %vm143, %v29, 0
    %v148 = vsel %vm143, %v30, 0
    %v151 = vsel %vm143, %v31, 0
    %v154 = vsel %vm143, %v32, 0
    %v157 = vsel %vm143, %v33, 0
    %v160 = vsel %vm143, %v34, 0
    %v163 = vsel %vm143, %v35, 0
    %v166 = vsel %vm143, %v36, 0
    %v169 = vsel %vm143, %v37, 0
    %v172 = vsel %vm143, %v38, 0
    %v175 = vsel %vm143, %v39, 0
    %v178 = vsel %vm143, %v40, 0
    %v181 = vsel %vm143, %v41, 0
    %v184 = vsel %vm143, %v42, 0
    %v187 = vsel %vm143, %v43, 0
    %v190 = vsel %vm143, %v44, 0
    %192 = vmatprep.subr.mxu0 0.0
    %193 = vmatpush1.msra.mxu0 0.0
    %194 = vmatprep.subr.mxu0 0.0
    %195 = vmatpush1.msra.mxu0 0.0
    %196 = vmatprep.subr.mxu0 0.0
    %197 = vmatpush1.msra.mxu0 0.0
    %198 = vmatprep.subr.mxu0 0.0
    %199 = vmatpush1.msra.mxu0 0.0
    %200 = vmatprep.subr.mxu0 0.0
    %201 = vmatpush1.msra.mxu0 0.0
    %202 = vmatprep.subr.mxu0 0.0
    %203 = vmatpush1.msra.mxu0 0.0
    %204 = vmatprep.subr.mxu0 0.0
    %205 = vmatpush1.msra.mxu0 0.0
    %206 = vmatprep.subr.mxu0 0.0
    %207 = vmatpush1.msra.mxu0 0.0
    %208 = vmatprep.subr.mxu0 0.0
    %209 = vmatpush1.msra.mxu0 0.0
    %210 = vmatprep.subr.mxu0 0.0
    %211 = vmatpush1.msra.mxu0 0.0
    %212 = vmatprep.subr.mxu0 0.0
    %213 = vmatpush1.msra.mxu0 0.0
    %214 = vmatprep.subr.mxu0 0.0
    %215 = vmatpush1.msra.mxu0 0.0
    %216 = vmatprep.subr.mxu0 0.0
    %217 = vmatpush1.msra.mxu0 0.0
    %218 = vmatprep.subr.mxu0 0.0
    %219 = vmatpush1.msra.mxu0 0.0
    %220 = vmatprep.subr.mxu0 0.0
    %221 = vmatpush1.msra.mxu0 %v46
    %222 = vmatprep.subr.mxu0 0.0
    %223 = vmatpush1.msra.mxu0 %v45
    %224 = vmatprep.subr.mxu0 0.0
    %225 = vmatpush2.msra.mxu0 0.0
    %226 = vmatprep.subr.mxu0 0.0
    %227 = vmatpush2.msra.mxu0 0.0
    %228 = vmatprep.subr.mxu0 0.0
    %229 = vmatpush2.msra.mxu0 0.0
    %230 = vmatprep.subr.mxu0 0.0
    %231 = vmatpush2.msra.mxu0 0.0
    %232 = vmatprep.subr.mxu0 0.0
    %233 = vmatpush2.msra.mxu0 0.0
    %234 = vmatprep.subr.mxu0 0.0
    %235 = vmatpush2.msra.mxu0 0.0
    %236 = vmatprep.subr.mxu0 0.0
    %237 = vmatpush2.msra.mxu0 0.0
    %238 = vmatprep.subr.mxu0 0.0
    %239 = vmatpush2.msra.mxu0 0.0
    %240 = vmatprep.subr.mxu0 0.0
    %241 = vmatpush2.msra.mxu0 0.0
    %242 = vmatprep.subr.mxu0 0.0
    %243 = vmatpush2.msra.mxu0 0.0
    %244 = vmatprep.subr.mxu0 0.0
    %245 = vmatpush2.msra.mxu0 0.0
    %246 = vmatprep.subr.mxu0 0.0
    %247 = vmatpush2.msra.mxu0 0.0
    %248 = vmatprep.subr.mxu0 0.0
    %249 = vmatpush2.msra.mxu0 0.0
    %250 = vmatprep.subr.mxu0 0.0
    %251 = vmatpush2.msra.mxu0 0.0
    %252 = vmatprep.subr.mxu0 0.0
    %253 = vmatpush2.msra.mxu0 0.0
    %254 = vmatprep.subr.mxu0 0.0
    %255 = vmatpush2.msra.mxu0 0.0
    %256 = vmatprep.mubr.f32.mxu0 0.0
    %257 = vmatmul.mubr.f32.gmra.mxu0 %v145
    %v258 = vpop.f32.mrf.mxu0
    %v259 = vadd.f32 %v66, %v258
    %v260 = vpop.f32.mrf.mxu0
    %261 = vmatprep.mubr.f32.mxu0 0.0
    %262 = vmatmul.mubr.f32.gmra.mxu0 %v148
    %v263 = vpop.f32.mrf.mxu0
    %v264 = vadd.f32 %v71, %v263
    %v265 = vpop.f32.mrf.mxu0
    %266 = vmatprep.mubr.f32.mxu0 0.0
    %267 = vmatmul.mubr.f32.gmra.mxu0 %v151
    %v268 = vpop.f32.mrf.mxu0
    %v269 = vadd.f32 %v76, %v268
    %v270 = vpop.f32.mrf.mxu0
    %271 = vmatprep.mubr.f32.mxu0 0.0
    %272 = vmatmul.mubr.f32.gmra.mxu0 %v154
    %v273 = vpop.f32.mrf.mxu0
    %v274 = vadd.f32 %v81, %v273
    %v275 = vpop.f32.mrf.mxu0
    %276 = vmatprep.mubr.f32.mxu0 0.0
    %277 = vmatmul.mubr.f32.gmra.mxu0 %v157
    %v278 = vpop.f32.mrf.mxu0
    %v279 = vadd.f32 %v86, %v278
    %v280 = vpop.f32.mrf.mxu0
    %281 = vmatprep.mubr.f32.mxu0 0.0
    %282 = vmatmul.mubr.f32.gmra.mxu0 %v160
    %v283 = vpop.f32.mrf.mxu0
    %v284 = vadd.f32 %v91, %v283
    %v285 = vpop.f32.mrf.mxu0
    %286 = vmatprep.mubr.f32.mxu0 0.0
    %287 = vmatmul.mubr.f32.gmra.mxu0 %v163
    %v288 = vpop.f32.mrf.mxu0
    %v289 = vadd.f32 %v96, %v288
    %v290 = vpop.f32.mrf.mxu0
    %291 = vmatprep.mubr.f32.mxu0 0.0
    %292 = vmatmul.mubr.f32.gmra.mxu0 %v166
    %v293 = vpop.f32.mrf.mxu0
    %v294 = vadd.f32 %v101, %v293
    %v295 = vpop.f32.mrf.mxu0
    %296 = vmatprep.mubr.f32.mxu0 0.0
    %297 = vmatmul.mubr.f32.gmra.mxu0 %v169
    %v298 = vpop.f32.mrf.mxu0
    %v299 = vadd.f32 %v106, %v298
    %v300 = vpop.f32.mrf.mxu0
    %301 = vmatprep.mubr.f32.mxu0 0.0
    %302 = vmatmul.mubr.f32.gmra.mxu0 %v172
    %v303 = vpop.f32.mrf.mxu0
    %v304 = vadd.f32 %v111, %v303
    %v305 = vpop.f32.mrf.mxu0
    %306 = vmatprep.mubr.f32.mxu0 0.0
    %307 = vmatmul.mubr.f32.gmra.mxu0 %v175
    %v308 = vpop.f32.mrf.mxu0
    %v309 = vadd.f32 %v116, %v308
    %v310 = vpop.f32.mrf.mxu0
    %311 = vmatprep.mubr.f32.mxu0 0.0
    %312 = vmatmul.mubr.f32.gmra.mxu0 %v178
    %v313 = vpop.f32.mrf.mxu0
    %v314 = vadd.f32 %v121, %v313
    %v315 = vpop.f32.mrf.mxu0
    %316 = vmatprep.mubr.f32.mxu0 0.0
    %317 = vmatmul.mubr.f32.gmra.mxu0 %v181
    %v318 = vpop.f32.mrf.mxu0
    %v319 = vadd.f32 %v126, %v318
    %v320 = vpop.f32.mrf.mxu0
    %321 = vmatprep.mubr.f32.mxu0 0.0
    %322 = vmatmul.mubr.f32.gmra.mxu0 %v184
    %v323 = vpop.f32.mrf.mxu0
    %v324 = vadd.f32 %v131, %v323
    %v325 = vpop.f32.mrf.mxu0
    %326 = vmatprep.mubr.f32.mxu0 0.0
    %327 = vmatmul.mubr.f32.gmra.mxu0 %v187
    %v328 = vpop.f32.mrf.mxu0
    %v329 = vadd.f32 %v136, %v328
    %v330 = vpop.f32.mrf.mxu0
    %331 = vmatprep.mubr.f32.mxu0 0.0
    %332 = vmatmul.mubr.f32.gmra.mxu0 %v190
    %v333 = vpop.f32.mrf.mxu0
    %v334 = vadd.f32 %v141, %v333
    %v335 = vpop.f32.mrf.mxu0
    %336 = vdwg.mxu0
    %v337 = vmax.f32 %v259, 0.0
    %v338 = vmax.f32 %v264, 0.0
    %v339 = vmax.f32 %v269, 0.0
    %v340 = vmax.f32 %v274, 0.0
    %v341 = vmax.f32 %v279, 0.0
    %v342 = vmax.f32 %v284, 0.0
    %v343 = vmax.f32 %v289, 0.0
    %v344 = vmax.f32 %v294, 0.0
    %v345 = vmax.f32 %v299, 0.0
    %v346 = vmax.f32 %v304, 0.0
    %v347 = vmax.f32 %v309, 0.0
    %v348 = vmax.f32 %v314, 0.0
    %v349 = vmax.f32 %v319, 0.0
    %v350 = vmax.f32 %v324, 0.0
    %v351 = vmax.f32 %v329, 0.0
    %v352 = vmax.f32 %v334, 0.0
    %v353 = vld [vmem:[%s3] sm:$0xff]
    %v354 = vld [vmem:[%s3 + $0x8] sm:$0xff]
    %v355 = vld [vmem:[%s3 + $0x10] sm:$0xff]
    %v356 = vld [vmem:[%s3 + $0x18] sm:$0xff]
    %v357 = vld [vmem:[%s3 + $0x20] sm:$0xff]
    %v358 = vld [vmem:[%s3 + $0x28] sm:$0xff]
    %v359 = vld [vmem:[%s3 + $0x30] sm:$0xff]
    %v360 = vld [vmem:[%s3 + $0x38] sm:$0xff]
    %v361 = vld [vmem:[%s3 + $0x40] sm:$0xff]
    %v362 = vld [vmem:[%s3 + $0x48] sm:$0xff]
    %v363 = vld [vmem:[%s3 + $0x50] sm:$0xff]
    %v364 = vld [vmem:[%s3 + $0x58] sm:$0xff]
    %v365 = vld [vmem:[%s3 + $0x60] sm:$0xff]
    %v366 = vld [vmem:[%s3 + $0x68] sm:$0xff]
    %v367 = vld [vmem:[%s3 + $0x70] sm:$0xff]
    %v368 = vld [vmem:[%s3 + $0x78] sm:$0xff]
    %v369 = vld [vmem:[%s4] sm:$0xff]
    %v370 = vld [vmem:[%s4 + $0x8] sm:$0xff]
    %v371 = vld [vmem:[%s4 + $0x10] sm:$0xff]
    %v372 = vld [vmem:[%s4 + $0x18] sm:$0xff]
    %v373 = vld [vmem:[%s4 + $0x20] sm:$0xff]
    %v374 = vld [vmem:[%s4 + $0x28] sm:$0xff]
    %v375 = vld [vmem:[%s4 + $0x30] sm:$0xff]
    %v376 = vld [vmem:[%s4 + $0x38] sm:$0xff]
    %v377 = vld [vmem:[%s4 + $0x40] sm:$0xff]
    %v378 = vld [vmem:[%s4 + $0x48] sm:$0xff]
    %v379 = vld [vmem:[%s4 + $0x50] sm:$0xff]
    %v380 = vld [vmem:[%s4 + $0x58] sm:$0xff]
    %v381 = vld [vmem:[%s4 + $0x60] sm:$0xff]
    %v382 = vld [vmem:[%s4 + $0x68] sm:$0xff]
    %v383 = vld [vmem:[%s4 + $0x70] sm:$0xff]
    %v384 = vld [vmem:[%s4 + $0x78] sm:$0xff]
    %386 = vset.pattern.permute.xlu0 0
    %387 = vperm.xlu0 %386, %v369
    %v388 = vpop.permute.xlu0 %387
    %391 = vset.pattern.permute.xlu0 0
    %392 = vperm.xlu0 %391, %v370
    %v393 = vpop.permute.xlu0 %392
    %396 = vset.pattern.permute.xlu0 0
    %397 = vperm.xlu0 %396, %v371
    %v398 = vpop.permute.xlu0 %397
    %401 = vset.pattern.permute.xlu0 0
    %402 = vperm.xlu0 %401, %v372
    %v403 = vpop.permute.xlu0 %402
    %406 = vset.pattern.permute.xlu0 0
    %407 = vperm.xlu0 %406, %v373
    %v408 = vpop.permute.xlu0 %407
    %411 = vset.pattern.permute.xlu0 0
    %412 = vperm.xlu0 %411, %v374
    %v413 = vpop.permute.xlu0 %412
    %416 = vset.pattern.permute.xlu0 0
    %417 = vperm.xlu0 %416, %v375
    %v418 = vpop.permute.xlu0 %417
    %421 = vset.pattern.permute.xlu0 0
    %422 = vperm.xlu0 %421, %v376
    %v423 = vpop.permute.xlu0 %422
    %426 = vset.pattern.permute.xlu0 0
    %427 = vperm.xlu0 %426, %v377
    %v428 = vpop.permute.xlu0 %427
    %431 = vset.pattern.permute.xlu0 0
    %432 = vperm.xlu0 %431, %v378
    %v433 = vpop.permute.xlu0 %432
    %436 = vset.pattern.permute.xlu0 0
    %437 = vperm.xlu0 %436, %v379
    %v438 = vpop.permute.xlu0 %437
    %441 = vset.pattern.permute.xlu0 0
    %442 = vperm.xlu0 %441, %v380
    %v443 = vpop.permute.xlu0 %442
    %446 = vset.pattern.permute.xlu0 0
    %447 = vperm.xlu0 %446, %v381
    %v448 = vpop.permute.xlu0 %447
    %451 = vset.pattern.permute.xlu0 0
    %452 = vperm.xlu0 %451, %v382
    %v453 = vpop.permute.xlu0 %452
    %456 = vset.pattern.permute.xlu0 0
    %457 = vperm.xlu0 %456, %v383
    %v458 = vpop.permute.xlu0 %457
    %461 = vset.pattern.permute.xlu0 0
    %462 = vperm.xlu0 %461, %v384
    %v463 = vpop.permute.xlu0 %462
    %465 = vmatprep.subr.mxu0 0.0
    %466 = vmatpush1.msra.mxu0 %v352
    %467 = vmatprep.subr.mxu0 0.0
    %468 = vmatpush1.msra.mxu0 %v351
    %469 = vmatprep.subr.mxu0 0.0
    %470 = vmatpush1.msra.mxu0 %v350
    %471 = vmatprep.subr.mxu0 0.0
    %472 = vmatpush1.msra.mxu0 %v349
    %473 = vmatprep.subr.mxu0 0.0
    %474 = vmatpush1.msra.mxu0 %v348
    %475 = vmatprep.subr.mxu0 0.0
    %476 = vmatpush1.msra.mxu0 %v347
    %477 = vmatprep.subr.mxu0 0.0
    %478 = vmatpush1.msra.mxu0 %v346
    %479 = vmatprep.subr.mxu0 0.0
    %480 = vmatpush1.msra.mxu0 %v345
    %481 = vmatprep.subr.mxu0 0.0
    %482 = vmatpush1.msra.mxu0 %v344
    %483 = vmatprep.subr.mxu0 0.0
    %484 = vmatpush1.msra.mxu0 %v343
    %485 = vmatprep.subr.mxu0 0.0
    %486 = vmatpush1.msra.mxu0 %v342
    %487 = vmatprep.subr.mxu0 0.0
    %488 = vmatpush1.msra.mxu0 %v341
    %489 = vmatprep.subr.mxu0 0.0
    %490 = vmatpush1.msra.mxu0 %v340
    %491 = vmatprep.subr.mxu0 0.0
    %492 = vmatpush1.msra.mxu0 %v339
    %493 = vmatprep.subr.mxu0 0.0
    %494 = vmatpush1.msra.mxu0 %v338
    %495 = vmatprep.subr.mxu0 0.0
    %496 = vmatpush1.msra.mxu0 %v337
    %497 = vmatprep.subr.mxu0 0.0
    %498 = vmatpush2.msra.mxu0 0.0
    %499 = vmatprep.subr.mxu0 0.0
    %500 = vmatpush2.msra.mxu0 0.0
    %501 = vmatprep.subr.mxu0 0.0
    %502 = vmatpush2.msra.mxu0 0.0
    %503 = vmatprep.subr.mxu0 0.0
    %504 = vmatpush2.msra.mxu0 0.0
    %505 = vmatprep.subr.mxu0 0.0
    %506 = vmatpush2.msra.mxu0 0.0
    %507 = vmatprep.subr.mxu0 0.0
    %508 = vmatpush2.msra.mxu0 0.0
    %509 = vmatprep.subr.mxu0 0.0
    %510 = vmatpush2.msra.mxu0 0.0
    %511 = vmatprep.subr.mxu0 0.0
    %512 = vmatpush2.msra.mxu0 0.0
    %513 = vmatprep.subr.mxu0 0.0
    %514 = vmatpush2.msra.mxu0 0.0
    %515 = vmatprep.subr.mxu0 0.0
    %516 = vmatpush2.msra.mxu0 0.0
    %517 = vmatprep.subr.mxu0 0.0
    %518 = vmatpush2.msra.mxu0 0.0
    %519 = vmatprep.subr.mxu0 0.0
    %520 = vmatpush2.msra.mxu0 0.0
    %521 = vmatprep.subr.mxu0 0.0
    %522 = vmatpush2.msra.mxu0 0.0
    %523 = vmatprep.subr.mxu0 0.0
    %524 = vmatpush2.msra.mxu0 0.0
    %525 = vmatprep.subr.mxu0 0.0
    %526 = vmatpush2.msra.mxu0 0.0
    %527 = vmatprep.subr.mxu0 0.0
    %528 = vmatpush2.msra.mxu0 0.0
    %529 = vmatprep.mubr.f32.mxu0 0.0
    %530 = vmatmul.mubr.f32.gmra.mxu0 %v353
    %v531 = vpop.f32.mrf.mxu0
    %v532 = vadd.f32 %v388, %v531
    %v533 = vpop.f32.mrf.mxu0
    %534 = vmatprep.mubr.f32.mxu0 0.0
    %535 = vmatmul.mubr.f32.gmra.mxu0 %v354
    %v536 = vpop.f32.mrf.mxu0
    %v537 = vadd.f32 %v393, %v536
    %v538 = vpop.f32.mrf.mxu0
    %539 = vmatprep.mubr.f32.mxu0 0.0
    %540 = vmatmul.mubr.f32.gmra.mxu0 %v355
    %v541 = vpop.f32.mrf.mxu0
    %v542 = vadd.f32 %v398, %v541
    %v543 = vpop.f32.mrf.mxu0
    %544 = vmatprep.mubr.f32.mxu0 0.0
    %545 = vmatmul.mubr.f32.gmra.mxu0 %v356
    %v546 = vpop.f32.mrf.mxu0
    %v547 = vadd.f32 %v403, %v546
    %v548 = vpop.f32.mrf.mxu0
    %549 = vmatprep.mubr.f32.mxu0 0.0
    %550 = vmatmul.mubr.f32.gmra.mxu0 %v357
    %v551 = vpop.f32.mrf.mxu0
    %v552 = vadd.f32 %v408, %v551
    %v553 = vpop.f32.mrf.mxu0
    %554 = vmatprep.mubr.f32.mxu0 0.0
    %555 = vmatmul.mubr.f32.gmra.mxu0 %v358
    %v556 = vpop.f32.mrf.mxu0
    %v557 = vadd.f32 %v413, %v556
    %v558 = vpop.f32.mrf.mxu0
    %559 = vmatprep.mubr.f32.mxu0 0.0
    %560 = vmatmul.mubr.f32.gmra.mxu0 %v359
    %v561 = vpop.f32.mrf.mxu0
    %v562 = vadd.f32 %v418, %v561
    %v563 = vpop.f32.mrf.mxu0
    %564 = vmatprep.mubr.f32.mxu0 0.0
    %565 = vmatmul.mubr.f32.gmra.mxu0 %v360
    %v566 = vpop.f32.mrf.mxu0
    %v567 = vadd.f32 %v423, %v566
    %v568 = vpop.f32.mrf.mxu0
    %569 = vmatprep.mubr.f32.mxu0 0.0
    %570 = vmatmul.mubr.f32.gmra.mxu0 %v361
    %v571 = vpop.f32.mrf.mxu0
    %v572 = vadd.f32 %v428, %v571
    %v573 = vpop.f32.mrf.mxu0
    %574 = vmatprep.mubr.f32.mxu0 0.0
    %575 = vmatmul.mubr.f32.gmra.mxu0 %v362
    %v576 = vpop.f32.mrf.mxu0
    %v577 = vadd.f32 %v433, %v576
    %v578 = vpop.f32.mrf.mxu0
    %579 = vmatprep.mubr.f32.mxu0 0.0
    %580 = vmatmul.mubr.f32.gmra.mxu0 %v363
    %v581 = vpop.f32.mrf.mxu0
    %v582 = vadd.f32 %v438, %v581
    %v583 = vpop.f32.mrf.mxu0
    %584 = vmatprep.mubr.f32.mxu0 0.0
    %585 = vmatmul.mubr.f32.gmra.mxu0 %v364
    %v586 = vpop.f32.mrf.mxu0
    %v587 = vadd.f32 %v443, %v586
    %v588 = vpop.f32.mrf.mxu0
    %589 = vmatprep.mubr.f32.mxu0 0.0
    %590 = vmatmul.mubr.f32.gmra.mxu0 %v365
    %v591 = vpop.f32.mrf.mxu0
    %v592 = vadd.f32 %v448, %v591
    %v593 = vpop.f32.mrf.mxu0
    %594 = vmatprep.mubr.f32.mxu0 0.0
    %595 = vmatmul.mubr.f32.gmra.mxu0 %v366
    %v596 = vpop.f32.mrf.mxu0
    %v597 = vadd.f32 %v453, %v596
    %v598 = vpop.f32.mrf.mxu0
    %599 = vmatprep.mubr.f32.mxu0 0.0
    %600 = vmatmul.mubr.f32.gmra.mxu0 %v367
    %v601 = vpop.f32.mrf.mxu0
    %v602 = vadd.f32 %v458, %v601
    %v603 = vpop.f32.mrf.mxu0
    %604 = vmatprep.mubr.f32.mxu0 0.0
    %605 = vmatmul.mubr.f32.gmra.mxu0 %v368
    %v606 = vpop.f32.mrf.mxu0
    %v607 = vadd.f32 %v463, %v606
    %v608 = vpop.f32.mrf.mxu0
    %609 = vdwg.mxu0
    %v610 = vmax.f32 %v532, 0.0
    %v611 = vmax.f32 %v537, 0.0
    %v612 = vmax.f32 %v542, 0.0
    %v613 = vmax.f32 %v547, 0.0
    %v614 = vmax.f32 %v552, 0.0
    %v615 = vmax.f32 %v557, 0.0
    %v616 = vmax.f32 %v562, 0.0
    %v617 = vmax.f32 %v567, 0.0
    %v618 = vmax.f32 %v572, 0.0
    %v619 = vmax.f32 %v577, 0.0
    %v620 = vmax.f32 %v582, 0.0
    %v621 = vmax.f32 %v587, 0.0
    %v622 = vmax.f32 %v592, 0.0
    %v623 = vmax.f32 %v597, 0.0
    %v624 = vmax.f32 %v602, 0.0
    %v625 = vmax.f32 %v607, 0.0
    %v626 = vld [vmem:[%s5] sm:$0xff]
    %627 = vmatprep.subr.mxu0 0.0
    %628 = vmatpush1.msra.mxu0 %v625
    %629 = vmatprep.subr.mxu0 0.0
    %630 = vmatpush1.msra.mxu0 %v624
    %631 = vmatprep.subr.mxu0 0.0
    %632 = vmatpush1.msra.mxu0 %v623
    %633 = vmatprep.subr.mxu0 0.0
    %634 = vmatpush1.msra.mxu0 %v622
    %635 = vmatprep.subr.mxu0 0.0
    %636 = vmatpush1.msra.mxu0 %v621
    %637 = vmatprep.subr.mxu0 0.0
    %638 = vmatpush1.msra.mxu0 %v620
    %639 = vmatprep.subr.mxu0 0.0
    %640 = vmatpush1.msra.mxu0 %v619
    %641 = vmatprep.subr.mxu0 0.0
    %642 = vmatpush1.msra.mxu0 %v618
    %643 = vmatprep.subr.mxu0 0.0
    %644 = vmatpush1.msra.mxu0 %v617
    %645 = vmatprep.subr.mxu0 0.0
    %646 = vmatpush1.msra.mxu0 %v616
    %647 = vmatprep.subr.mxu0 0.0
    %648 = vmatpush1.msra.mxu0 %v615
    %649 = vmatprep.subr.mxu0 0.0
    %650 = vmatpush1.msra.mxu0 %v614
    %651 = vmatprep.subr.mxu0 0.0
    %652 = vmatpush1.msra.mxu0 %v613
    %653 = vmatprep.subr.mxu0 0.0
    %654 = vmatpush1.msra.mxu0 %v612
    %655 = vmatprep.subr.mxu0 0.0
    %656 = vmatpush1.msra.mxu0 %v611
    %657 = vmatprep.subr.mxu0 0.0
    %658 = vmatpush1.msra.mxu0 %v610
    %659 = vmatprep.subr.mxu0 0.0
    %660 = vmatpush2.msra.mxu0 0.0
    %661 = vmatprep.subr.mxu0 0.0
    %662 = vmatpush2.msra.mxu0 0.0
    %663 = vmatprep.subr.mxu0 0.0
    %664 = vmatpush2.msra.mxu0 0.0
    %665 = vmatprep.subr.mxu0 0.0
    %666 = vmatpush2.msra.mxu0 0.0
    %667 = vmatprep.subr.mxu0 0.0
    %668 = vmatpush2.msra.mxu0 0.0
    %669 = vmatprep.subr.mxu0 0.0
    %670 = vmatpush2.msra.mxu0 0.0
    %671 = vmatprep.subr.mxu0 0.0
    %672 = vmatpush2.msra.mxu0 0.0
    %673 = vmatprep.subr.mxu0 0.0
    %674 = vmatpush2.msra.mxu0 0.0
    %675 = vmatprep.subr.mxu0 0.0
    %676 = vmatpush2.msra.mxu0 0.0
    %677 = vmatprep.subr.mxu0 0.0
    %678 = vmatpush2.msra.mxu0 0.0
    %679 = vmatprep.subr.mxu0 0.0
    %680 = vmatpush2.msra.mxu0 0.0
    %681 = vmatprep.subr.mxu0 0.0
    %682 = vmatpush2.msra.mxu0 0.0
    %683 = vmatprep.subr.mxu0 0.0
    %684 = vmatpush2.msra.mxu0 0.0
    %685 = vmatprep.subr.mxu0 0.0
    %686 = vmatpush2.msra.mxu0 0.0
    %687 = vmatprep.subr.mxu0 0.0
    %688 = vmatpush2.msra.mxu0 0.0
    %689 = vmatprep.subr.mxu0 0.0
    %690 = vmatpush2.msra.mxu0 0.0
    %691 = vmatprep.mubr.f32.mxu0 0.0
    %692 = vmatmul.mubr.f32.gmra.mxu0 %v626
    %v693 = vpop.f32.mrf.mxu0
    %v694 = vadd.f32 0.0, %v693
    %v695 = vpop.f32.mrf.mxu0
    %696 = vdwg.mxu0
    %v697 = vld [vmem:[#allocation2] sm:$0x1]
    %699 = vset.pattern.permute.xlu0 0
    %700 = vperm.xlu0 %699, %v697
    %v701 = vpop.permute.xlu0 %700
    %v703 = vlaneseq
    %v704 = vshrl.u32 %v703, 7
    %v705 = vsub.s32 0, %v704
    %v706 = vrot.slane %v701, %v705
    %v707 = vadd.f32 %v694, %v706
    %708 = vst [vmem:[#allocation3] sm:$0x1] %v707
    // Predicated region
    $region30: #{tpu_custom_call.1} parent=1 // pred_check
      _
    $region31: #{tpu_custom_call.1} parent=1 // pred_check_branch
      %710 = sbr.rel (0) target = $region33
    $region32: #{tpu_custom_call.1} parent=1 // pred_region
      %s712 = ssub.s32 16, 16
      %713 = vsyncadd [#allocation4], %s712
      %s715 = sshll.u32 [#allocation3], 4
      %s716 = int_to_ptr.vmem [resolvable:$true] %s715
      %718 = dma.vmem_to_hbm [thread:$0]  %s716, 16, %s7, [#allocation4]
    $region33: #{tpu_custom_call.1} parent=1 // pred_fallthru
      _
    // Predicated region
    $region34: #{tpu_custom_call.1} parent=1 // pred_check
      _
    $region35: #{tpu_custom_call.1} parent=1 // pred_check_branch
      %720 = sbr.rel (0) target = $region37
    $region36: #{tpu_custom_call.1} parent=1 // pred_region
      %721 = dma.done [#allocation4], 16
    $region37: #{tpu_custom_call.1} parent=1 // pred_fallthru
      _
    %722 = vsyncpa [#allocation4], 1

</llo_original>
